<compile_context>
chip_gen: v7x
topology: tpu7x:2x2x1
jax: 0.10.0
libtpu: 0.0.40
codegen_flags: <defaults>
</compile_context>

<pallas_src>
import functools

import jax
import jax.numpy as jnp
from jax import lax
from jax.experimental import pallas as pl
from jax.experimental.pallas import tpu as pltpu


def _attention_kernel(q_ref, k_ref, v_ref, len_ref, ctx_ref, mask_ref,
                      m_sc, l_sc, acc_sc, *, total_t):
    # q_ref    : (bn, K)     f32  (resident across the T axis: same block index)
    # k_ref    : (tt, bn, K) f32  encoder-native layout (no wrapper transpose)
    # v_ref    : (tt, bn, V) f32
    # len_ref  : (bn, 1)     i32
    # ctx_ref  : (bn, V)     f32  output (written once, at the last T tile)
    # mask_ref : (bn, T)     f32  output (written once, lane-dense full-T store)
    # m_sc/l_sc: (bn, 1)     f32  running max / running softmax denominator
    # acc_sc   : (bn, V)     f32  running (un-normalized) context accumulator
    j = pl.program_id(1)
    nt = pl.num_programs(1)
    tt, bn, K = k_ref.shape

    # ---- init running stats for this batch block (first T tile) ----
    @pl.when(j == 0)
    def _init():
        m_sc[...] = jnp.full(m_sc.shape, -jnp.inf, dtype=m_sc.dtype)
        l_sc[...] = jnp.zeros(l_sc.shape, dtype=l_sc.dtype)
        acc_sc[...] = jnp.zeros(acc_sc.shape, dtype=acc_sc.dtype)

    q = q_ref[...]                       # (bn, K)
    k = k_ref[...]                       # (tt, bn, K)
    v = v_ref[...]                       # (tt, bn, V)
    lens = len_ref[...]                  # (bn, 1) int32

    # ---- energy[t, n] = sum_k key[t, n, k] * query[n, k] ----
    # VPU broadcast-multiply; the K-reduction runs on the otherwise-idle MXU
    # (ones-matvec) instead of the 2-unit XLU cross-lane path.
    prod = (k * q[None, :, :]).reshape(tt * bn, K)    # layout no-op (bn % 8 == 0)
    ones_k = jnp.ones((K, 1), dtype=jnp.float32)
    energy = jnp.dot(prod, ones_k, preferred_element_type=jnp.float32)
    energy = energy.reshape(tt, bn, 1)                # split leading dim: free

    # ---- PyTorch-faithful masking: score = mask * energy. Positions past
    #      speech_len keep score exactly 0 and still take part in the softmax
    #      (and contribute their value rows), exactly like the torch code. ----
    t_idx = lax.broadcasted_iota(jnp.int32, (tt, bn, 1), 0) + j * tt
    in_len = t_idx < lens[None, :, :]
    score = jnp.where(in_len, energy, 0.0)            # (tt, bn, 1)

    if (total_t % tt) != 0:
        # Last T tile overruns the array: exclude the padded rows entirely and
        # make sure stale VMEM contents in the value buffer can't leak NaNs.
        valid = t_idx < total_t
        score = jnp.where(valid, score, -jnp.inf)
        v = jnp.where(valid, v, 0.0)

    # ---- online softmax update over the T grid axis (flash-style) ----
    m_prev = m_sc[...]                                  # (bn, 1)
    m_new = jnp.maximum(m_prev, jnp.max(score, axis=0)) # (bn, 1)
    alpha = jnp.exp(m_prev - m_new)                     # == 0 on the first tile
    p = jnp.exp(score - m_new[None, :, :])              # (tt, bn, 1)
    l_sc[...] = alpha * l_sc[...] + jnp.sum(p, axis=0)
    acc_sc[...] = alpha * acc_sc[...] + jnp.sum(p * v, axis=0)
    m_sc[...] = m_new

    # ---- finalize: exact divide (no approx reciprocal) + mask output ----
    @pl.when(j == nt - 1)
    def _finalize():
        ctx_ref[...] = (acc_sc[...] / l_sc[...]).astype(ctx_ref.dtype)
        t_all = lax.broadcasted_iota(jnp.int32, (bn, mask_ref.shape[1]), 1)
        mask_ref[...] = (t_all < lens).astype(mask_ref.dtype)


def attention_forward(query, key, value, speech_len, *, bn=None, tt=None):
    """query (N,K) f32, key (T,N,K) f32, value (T,N,V) f32, speech_len (N,) int."""
    T, N, K = key.shape
    V = value.shape[-1]
    assert query.shape == (N, K)
    assert value.shape[:2] == (T, N)

    orig_n = N
    lens = jnp.asarray(speech_len, dtype=jnp.int32).reshape(N, 1)

    # Pad the batch to a sublane multiple (8) so every block shape and the
    # in-kernel reshape are layout-trivial.  Only triggers for degenerate
    # batch sizes; realistic batches are already multiples of 8.
    if N % 8 != 0:
        pad = 8 - (N % 8)
        query = jnp.pad(query, ((0, pad), (0, 0)))
        key = jnp.pad(key, ((0, 0), (0, pad), (0, 0)))
        value = jnp.pad(value, ((0, 0), (0, pad), (0, 0)))
        lens = jnp.pad(lens, ((0, pad), (0, 0)))
        N += pad

    # Batch tile: at least two programs on the "parallel" axis whenever
    # possible (v7x has 2 TensorCores); multiple of 8, capped at 128 rows.
    if bn is None:
        if N <= 8:
            bn = N
        elif N <= 256:
            bn = 8 * ((N // 2 + 7) // 8)
        else:
            bn = 128
    bn = max(8, min(bn, N))

    # Generation-aware VMEM budget: ~48 MiB on v7x (64 MiB physical),
    # ~96 MiB on v5e/v6e (128 MiB physical).
    try:
        vmem_cap = int(pltpu.get_tpu_info().vmem_capacity_bytes)
    except Exception:
        vmem_cap = 64 * 1024 * 1024          # conservative fallback
    budget = (3 * vmem_cap) // 4

    # T tile: size the double-buffered key+value stream to ~half the budget;
    # the remainder covers outputs, scratch and compiler temporaries.
    if tt is None:
        kv_bytes_per_t_row = 2 * 2 * bn * (K + V) * 4     # dbl-buffered, f32
        tt = (budget // (2 * kv_bytes_per_t_row)) // 8 * 8
        tt = max(8, tt)
    tt = max(1, min(tt, T))

    nb = pl.cdiv(N, bn)
    nt = pl.cdiv(T, tt)

    # Tight, headroom-aware VMEM request (never the full physical capacity).
    est = 4 * (2 * (bn * K + tt * bn * K + tt * bn * V + bn)    # dbl-buffered inputs
               + 2 * (bn * V + bn * T)                          # dbl-buffered outputs
               + (2 * bn * 128 + bn * max(V, 128))              # scratch (lane-padded)
               + 2 * tt * bn * max(K, 128))                     # temporaries headroom
    vmem_limit = int(min(budget, max(2 * est, 16 * 1024 * 1024)))

    kernel = functools.partial(_attention_kernel, total_t=T)

    ctx, mask = pl.pallas_call(
        kernel,
        out_shape=(
            jax.ShapeDtypeStruct((N, V), query.dtype),
            jax.ShapeDtypeStruct((N, T), jnp.float32),
        ),
        grid=(nb, nt),
        in_specs=[
            pl.BlockSpec((bn, K), lambda i, j: (i, 0)),         # query (resident over j)
            pl.BlockSpec((tt, bn, K), lambda i, j: (j, i, 0)),  # key   (T,N,K) native
            pl.BlockSpec((tt, bn, V), lambda i, j: (j, i, 0)),  # value (T,N,V) native
            pl.BlockSpec((bn, 1), lambda i, j: (i, 0)),         # speech_len
        ],
        out_specs=(
            pl.BlockSpec((bn, V), lambda i, j: (i, 0)),         # context
            pl.BlockSpec((bn, T), lambda i, j: (i, 0)),         # mask (lane-dense full T)
        ),
        scratch_shapes=[
            pltpu.VMEM((bn, 1), jnp.float32),   # running max
            pltpu.VMEM((bn, 1), jnp.float32),   # running denominator
            pltpu.VMEM((bn, V), jnp.float32),   # running context accumulator
        ],
        compiler_params=pltpu.CompilerParams(
            dimension_semantics=("parallel", "arbitrary"),
            vmem_limit_bytes=vmem_limit,
        ),
    )(query, key, value, lens)

    if orig_n != N:
        ctx = ctx[:orig_n]
        mask = mask[:orig_n]
    return ctx, mask


def _reference(query, key, value, speech_len):
    """Pure-JAX replica of the PyTorch forward, for correctness checking."""
    kb = jnp.transpose(key, (1, 0, 2))
    vb = jnp.transpose(value, (1, 0, 2))
    energy = jnp.einsum("ntk,nk->nt", kb, query)
    T = kb.shape[1]
    mask = (jnp.arange(T)[None, :] < speech_len[:, None]).astype(jnp.float32)
    score = mask * energy
    attn = jax.nn.softmax(score, axis=1)
    attn = attn / jnp.sum(attn, axis=1, keepdims=True)
    ctx = jnp.einsum("nt,ntv->nv", attn, vb)
    return ctx, mask


if __name__ == "__main__":
    # No learnable parameters in this module (only a Softmax), nothing to init.
    N, T, K, V = 2, 40, 32, 48
    root = jax.random.PRNGKey(0)
    kq, kk, kv = jax.random.split(root, 3)
    query = jax.random.normal(kq, (N, K), dtype=jnp.float32)
    key_enc = jax.random.normal(kk, (T, N, K), dtype=jnp.float32)
    value_enc = jax.random.normal(kv, (T, N, V), dtype=jnp.float32)
    speech_len = jnp.array([40, 23], dtype=jnp.int32)

    # tt=16 forces multiple T tiles (with a partial tail) so the online-softmax
    # accumulator and the tail-masking path are both exercised.
    ctx, mask = attention_forward(query, key_enc, value_enc, speech_len, tt=16)
    jax.block_until_ready((ctx, mask))

    ref_ctx, ref_mask = _reference(query, key_enc, value_enc, speech_len)
    assert ctx.shape == (N, V) and mask.shape == (N, T)
    assert jnp.allclose(mask, ref_mask), "mask mismatch"
    assert jnp.allclose(ctx, ref_ctx, rtol=1e-4, atol=1e-4), "context mismatch"

    print("KERNEL_OK")
</pallas_src>

<mosaic_0001>
module attributes {stable_mosaic.version = 11 : i64} {
  func.func @_attention_kernel(%arg0: i32, %arg1: i32, %arg2: memref<8x32xf32, #tpu.memory_space<vmem>>, %arg3: memref<16x8x32xf32, #tpu.memory_space<vmem>>, %arg4: memref<16x8x48xf32, #tpu.memory_space<vmem>>, %arg5: memref<8x1xi32, #tpu.memory_space<vmem>>, %arg6: memref<8x48xf32, #tpu.memory_space<vmem>>, %arg7: memref<8x40xf32, #tpu.memory_space<vmem>>, %arg8: memref<8x1xf32, #tpu.memory_space<vmem>>, %arg9: memref<8x1xf32, #tpu.memory_space<vmem>>, %arg10: memref<8x48xf32, #tpu.memory_space<vmem>>) attributes {dimension_semantics = [#tpu.dimension_semantics<parallel>, #tpu.dimension_semantics<arbitrary>], iteration_bounds = array<i64: 1, 3>, scalar_prefetch = 0 : i64, scratch_operands = 3 : i64, tpu.core_type = #tpu.core_type<tc>, window_params = [{transform_indices = @transform_0, window_bounds = array<i64: 8, 32>}, {transform_indices = @transform_1, window_bounds = array<i64: 16, 8, 32>}, {transform_indices = @transform_2, window_bounds = array<i64: 16, 8, 48>}, {transform_indices = @transform_3, window_bounds = array<i64: 8, 1>}, {transform_indices = @transform_4, window_bounds = array<i64: 8, 48>}, {transform_indices = @transform_5, window_bounds = array<i64: 8, 40>}]} {
    %c0_i32 = arith.constant 0 : i32
    %0 = arith.cmpi eq, %arg1, %c0_i32 : i32
    %1 = arith.extui %0 : i1 to i32
    %c0_i32_0 = arith.constant 0 : i32
    %2 = arith.cmpi ne, %1, %c0_i32_0 : i32
    scf.if %2 {
      %cst_30 = arith.constant 0xFF800000 : f32
      %57 = vector.broadcast %cst_30 : f32 to vector<8x1xf32>
      %c0_31 = arith.constant 0 : index
      %c0_32 = arith.constant 0 : index
      %58 = vector.load %arg8[%c0_31, %c0_32] : memref<8x1xf32, #tpu.memory_space<vmem>>, vector<8x1xf32>
      tpu.vector_store %arg8[%c0_31, %c0_32], %57 {strides = array<i32>} : memref<8x1xf32, #tpu.memory_space<vmem>>, vector<8x1xf32>,
      %cst_33 = arith.constant 0.000000e+00 : f32
      %59 = vector.broadcast %cst_33 : f32 to vector<8x1xf32>
      %c0_34 = arith.constant 0 : index
      %c0_35 = arith.constant 0 : index
      %60 = vector.load %arg9[%c0_34, %c0_35] : memref<8x1xf32, #tpu.memory_space<vmem>>, vector<8x1xf32>
      tpu.vector_store %arg9[%c0_34, %c0_35], %59 {strides = array<i32>} : memref<8x1xf32, #tpu.memory_space<vmem>>, vector<8x1xf32>,
      %cst_36 = arith.constant 0.000000e+00 : f32
      %61 = vector.broadcast %cst_36 : f32 to vector<8x48xf32>
      %c0_37 = arith.constant 0 : index
      %c0_38 = arith.constant 0 : index
      %62 = vector.load %arg10[%c0_37, %c0_38] : memref<8x48xf32, #tpu.memory_space<vmem>>, vector<8x48xf32>
      tpu.vector_store %arg10[%c0_37, %c0_38], %61 {strides = array<i32>} : memref<8x48xf32, #tpu.memory_space<vmem>>, vector<8x48xf32>,
    } else {
    }
    %c0 = arith.constant 0 : index
    %c0_1 = arith.constant 0 : index
    %3 = vector.load %arg2[%c0, %c0_1] : memref<8x32xf32, #tpu.memory_space<vmem>>, vector<8x32xf32>
    %c0_2 = arith.constant 0 : index
    %c0_3 = arith.constant 0 : index
    %c0_4 = arith.constant 0 : index
    %4 = vector.load %arg3[%c0_2, %c0_3, %c0_4] : memref<16x8x32xf32, #tpu.memory_space<vmem>>, vector<16x8x32xf32>
    %c0_5 = arith.constant 0 : index
    %c0_6 = arith.constant 0 : index
    %c0_7 = arith.constant 0 : index
    %5 = vector.load %arg4[%c0_5, %c0_6, %c0_7] : memref<16x8x48xf32, #tpu.memory_space<vmem>>, vector<16x8x48xf32>
    %c0_8 = arith.constant 0 : index
    %c0_9 = arith.constant 0 : index
    %6 = vector.load %arg5[%c0_8, %c0_9] : memref<8x1xi32, #tpu.memory_space<vmem>>, vector<8x1xi32>
    %7 = vector.shape_cast %3 : vector<8x32xf32> to vector<1x8x32xf32>
    %8 = vector.broadcast %7 : vector<1x8x32xf32> to vector<16x8x32xf32>
    %9 = arith.mulf %4, %8 : vector<16x8x32xf32>
    %10 = vector.shape_cast %9 : vector<16x8x32xf32> to vector<128x32xf32>
    %cst = arith.constant 1.000000e+00 : f32
    %11 = vector.broadcast %cst : f32 to vector<32x1xf32>
    %cst_10 = arith.constant dense<0.000000e+00> : vector<128x1xf32>
    %12 = tpu.matmul %10, %11, %cst_10 {dimension_numbers = #tpu.dot_dimension_numbers<[1], [0], [0], [1], [0, 0, 1, 1], [], []>} : vector<128x32xf32>, vector<32x1xf32>, vector<128x1xf32> -> vector<128x1xf32>
    %13 = vector.shape_cast %12 : vector<128x1xf32> to vector<16x8x1xf32>
    %14 = tpu.iota {dimensions = array<i32: 0>} : vector<16x8x1xi32>
    %c16_i32 = arith.constant 16 : i32
    %15 = arith.muli %arg1, %c16_i32 : i32
    %16 = vector.broadcast %15 : i32 to vector<16x8x1xi32>
    %17 = arith.addi %14, %16 : vector<16x8x1xi32>
    %18 = vector.shape_cast %6 : vector<8x1xi32> to vector<1x8x1xi32>
    %19 = vector.broadcast %18 : vector<1x8x1xi32> to vector<16x8x1xi32>
    %20 = arith.cmpi slt, %17, %19 : vector<16x8x1xi32>
    %cst_11 = arith.constant 0.000000e+00 : f32
    %21 = vector.broadcast %cst_11 : f32 to vector<16x8x1xf32>
    %22 = arith.select %20, %13, %21 : vector<16x8x1xi1>, vector<16x8x1xf32>
    %c40_i32 = arith.constant 40 : i32
    %23 = vector.broadcast %c40_i32 : i32 to vector<16x8x1xi32>
    %24 = arith.cmpi slt, %17, %23 : vector<16x8x1xi32>
    %cst_12 = arith.constant 0xFF800000 : f32
    %25 = vector.broadcast %cst_12 : f32 to vector<16x8x1xf32>
    %26 = arith.select %24, %22, %25 : vector<16x8x1xi1>, vector<16x8x1xf32>
    %cst_13 = arith.constant 0.000000e+00 : f32
    %27 = vector.shape_cast %24 : vector<16x8x1xi1> to vector<16x8x1xi1>
    %28 = vector.broadcast %27 : vector<16x8x1xi1> to vector<16x8x48xi1>
    %29 = vector.broadcast %cst_13 : f32 to vector<16x8x48xf32>
    %30 = arith.select %28, %5, %29 : vector<16x8x48xi1>, vector<16x8x48xf32>
    %c0_14 = arith.constant 0 : index
    %c0_15 = arith.constant 0 : index
    %31 = vector.load %arg8[%c0_14, %c0_15] : memref<8x1xf32, #tpu.memory_space<vmem>>, vector<8x1xf32>
    %cst_16 = arith.constant dense<0xFF800000> : vector<8x1xf32>
    %32 = vector.multi_reduction <maximumf>, %26, %cst_16 [0] : vector<16x8x1xf32> to vector<8x1xf32>
    %33 = arith.maximumf %31, %32 : vector<8x1xf32>
    %34 = arith.subf %31, %33 : vector<8x1xf32>
    %35 = math.exp %34 : vector<8x1xf32>
    %36 = vector.shape_cast %33 : vector<8x1xf32> to vector<1x8x1xf32>
    %37 = vector.broadcast %36 : vector<1x8x1xf32> to vector<16x8x1xf32>
    %38 = arith.subf %26, %37 : vector<16x8x1xf32>
    %39 = math.exp %38 : vector<16x8x1xf32>
    %c0_17 = arith.constant 0 : index
    %c0_18 = arith.constant 0 : index
    %40 = vector.load %arg9[%c0_17, %c0_18] : memref<8x1xf32, #tpu.memory_space<vmem>>, vector<8x1xf32>
    %41 = arith.mulf %35, %40 : vector<8x1xf32>
    %cst_19 = arith.constant dense<0.000000e+00> : vector<8x1xf32>
    %42 = vector.multi_reduction <add>, %39, %cst_19 [0] : vector<16x8x1xf32> to vector<8x1xf32>
    %43 = arith.addf %41, %42 : vector<8x1xf32>
    %c0_20 = arith.constant 0 : index
    %c0_21 = arith.constant 0 : index
    %44 = vector.load %arg9[%c0_20, %c0_21] : memref<8x1xf32, #tpu.memory_space<vmem>>, vector<8x1xf32>
    tpu.vector_store %arg9[%c0_20, %c0_21], %43 {strides = array<i32>} : memref<8x1xf32, #tpu.memory_space<vmem>>, vector<8x1xf32>,
    %c0_22 = arith.constant 0 : index
    %c0_23 = arith.constant 0 : index
    %45 = vector.load %arg10[%c0_22, %c0_23] : memref<8x48xf32, #tpu.memory_space<vmem>>, vector<8x48xf32>
    %46 = vector.broadcast %35 : vector<8x1xf32> to vector<8x48xf32>
    %47 = arith.mulf %46, %45 : vector<8x48xf32>
    %48 = vector.broadcast %39 : vector<16x8x1xf32> to vector<16x8x48xf32>
    %49 = arith.mulf %48, %30 : vector<16x8x48xf32>
    %cst_24 = arith.constant dense<0.000000e+00> : vector<8x48xf32>
    %50 = vector.multi_reduction <add>, %49, %cst_24 [0] : vector<16x8x48xf32> to vector<8x48xf32>
    %51 = arith.addf %47, %50 : vector<8x48xf32>
    %c0_25 = arith.constant 0 : index
    %c0_26 = arith.constant 0 : index
    %52 = vector.load %arg10[%c0_25, %c0_26] : memref<8x48xf32, #tpu.memory_space<vmem>>, vector<8x48xf32>
    tpu.vector_store %arg10[%c0_25, %c0_26], %51 {strides = array<i32>} : memref<8x48xf32, #tpu.memory_space<vmem>>, vector<8x48xf32>,
    %c0_27 = arith.constant 0 : index
    %c0_28 = arith.constant 0 : index
    %53 = vector.load %arg8[%c0_27, %c0_28] : memref<8x1xf32, #tpu.memory_space<vmem>>, vector<8x1xf32>
    tpu.vector_store %arg8[%c0_27, %c0_28], %33 {strides = array<i32>} : memref<8x1xf32, #tpu.memory_space<vmem>>, vector<8x1xf32>,
    %c2_i32 = arith.constant 2 : i32
    %54 = arith.cmpi eq, %arg1, %c2_i32 : i32
    %55 = arith.extui %54 : i1 to i32
    %c0_i32_29 = arith.constant 0 : i32
    %56 = arith.cmpi ne, %55, %c0_i32_29 : i32
    scf.if %56 {
      %c0_30 = arith.constant 0 : index
      %c0_31 = arith.constant 0 : index
      %57 = vector.load %arg10[%c0_30, %c0_31] : memref<8x48xf32, #tpu.memory_space<vmem>>, vector<8x48xf32>
      %c0_32 = arith.constant 0 : index
      %c0_33 = arith.constant 0 : index
      %58 = vector.load %arg9[%c0_32, %c0_33] : memref<8x1xf32, #tpu.memory_space<vmem>>, vector<8x1xf32>
      %59 = vector.broadcast %58 : vector<8x1xf32> to vector<8x48xf32>
      %60 = arith.divf %57, %59 : vector<8x48xf32>
      %c0_34 = arith.constant 0 : index
      %c0_35 = arith.constant 0 : index
      %61 = vector.load %arg6[%c0_34, %c0_35] : memref<8x48xf32, #tpu.memory_space<vmem>>, vector<8x48xf32>
      tpu.vector_store %arg6[%c0_34, %c0_35], %60 {strides = array<i32>} : memref<8x48xf32, #tpu.memory_space<vmem>>, vector<8x48xf32>,
      %62 = tpu.iota {dimensions = array<i32: 1>} : vector<8x40xi32>
      %63 = vector.broadcast %6 : vector<8x1xi32> to vector<8x40xi32>
      %64 = arith.cmpi slt, %62, %63 : vector<8x40xi32>
      %65 = arith.extui %64 : vector<8x40xi1> to vector<8x40xi32>
      %66 = arith.sitofp %65 : vector<8x40xi32> to vector<8x40xf32>
      %c0_36 = arith.constant 0 : index
      %c0_37 = arith.constant 0 : index
      %67 = vector.load %arg7[%c0_36, %c0_37] : memref<8x40xf32, #tpu.memory_space<vmem>>, vector<8x40xf32>
      tpu.vector_store %arg7[%c0_36, %c0_37], %66 {strides = array<i32>} : memref<8x40xf32, #tpu.memory_space<vmem>>, vector<8x40xf32>,
    } else {
    }
    return
  }
  func.func @transform_0(%arg0: i32, %arg1: i32) -> (i32, i32) {
    %c0_i32 = arith.constant 0 : i32
    %c0_i32_0 = arith.constant 0 : i32
    return %arg0, %c0_i32 : i32, i32
  }
  func.func @transform_1(%arg0: i32, %arg1: i32) -> (i32, i32, i32) {
    %c0_i32 = arith.constant 0 : i32
    %c0_i32_0 = arith.constant 0 : i32
    return %arg1, %arg0, %c0_i32 : i32, i32, i32
  }
  func.func @transform_2(%arg0: i32, %arg1: i32) -> (i32, i32, i32) {
    %c0_i32 = arith.constant 0 : i32
    %c0_i32_0 = arith.constant 0 : i32
    return %arg1, %arg0, %c0_i32 : i32, i32, i32
  }
  func.func @transform_3(%arg0: i32, %arg1: i32) -> (i32, i32) {
    %c0_i32 = arith.constant 0 : i32
    %c0_i32_0 = arith.constant 0 : i32
    return %arg0, %c0_i32 : i32, i32
  }
  func.func @transform_4(%arg0: i32, %arg1: i32) -> (i32, i32) {
    %c0_i32 = arith.constant 0 : i32
    %c0_i32_0 = arith.constant 0 : i32
    return %arg0, %c0_i32 : i32, i32
  }
  func.func @transform_5(%arg0: i32, %arg1: i32) -> (i32, i32) {
    %c0_i32 = arith.constant 0 : i32
    %c0_i32_0 = arith.constant 0 : i32
    return %arg0, %c0_i32 : i32, i32
  }
}

</mosaic_0001>

<llo_original>
// kernel: tpu_custom_call.1
$region0: #{tpu_custom_call.1}
  #allocation0 [shape = 'u32[]', space=smem, size = 0x4, offset = 0x4, fixed_abs, tag = 'smem constant byte address 0x4 - core index']
  #allocation1 [shape = 'u32[144,128]{1,0:T(1,128)}', space=vmem, size = 0x12000, scoped, tag = 'internal scratch']
  #allocation2 [shape = 'f32[8,1]{1,0:T(8,128)}', space=vmem, size = 0x1000, scoped, tag = 'scratch operand']
  #allocation3 [shape = 'f32[8,1]{1,0:T(8,128)}', space=vmem, size = 0x1000, scoped, tag = 'scratch operand']
  #allocation4 [shape = 'f32[8,48]{1,0:T(8,128)}', space=vmem, size = 0x1000, scoped, tag = 'scratch operand']
  %s0 = inlined_call_operand.vmem [shape: f32[8,32], index: 0, kind: input, shape index: {}]
  %s1 = inlined_call_operand.vmem [shape: f32[40,8,32], index: 1, kind: input, shape index: {}]
  %s2 = inlined_call_operand.vmem [shape: f32[40,8,48], index: 2, kind: input, shape index: {}]
  %s3 = inlined_call_operand.vmem [shape: s32[8,1], index: 3, kind: input, shape index: {}]
  %s4 = inlined_call_operand.hbm [shape: f32[8,48], index: 4, kind: output, shape index: {0}]
  %s5 = inlined_call_operand.hbm [shape: f32[8,40], index: 5, kind: output, shape index: {1}]
  %6 = xla_tuple %s4, %s5
  %s7 = sld [smem:[#allocation0]]
  $region65: #{tpu_custom_call.1} parent=0
    _
  %s9 = ssub.s32 1, %s7
  %s10 = scalar_select 0, %s9, %s7
  $region1: #{tpu_custom_call.1} parent=0
    #allocation5 [shape = 'u8[4096]{0}', space=vmem, size = 0x1000, scoped, tag = 'output window, operand 0, single buffered']
    #allocation6 [shape = 's32[2]{0}', space=sflag, size = 0x8, scoped, tag = 'scoped memory for tpu_custom_call.1']
    #allocation7 [shape = 'u8[4096]{0}', space=vmem, size = 0x1000, scoped, tag = 'output window, operand 1, single buffered']
    #allocation8 [shape = 's32[1]{0}', space=sflag, size = 0x4, scoped, tag = 'scoped memory for tpu_custom_call.1']
    %11 = vsyncpa [#allocation6], 0
    %12 = vsyncpa [#allocation8], 0
    loop: start=0, step=1, limit=5
    $region2: #{tpu_custom_call.1} parent=1 // loop_pre_header
      _
    $region3: #{tpu_custom_call.1} parent=1 // loop_header
      %s14 = sphi 0, %s18
      %p15 = scmp.ge.s32.totalorder %s14, 5
      %s21 = sphi 0, %s33
      %s22 = sphi 0, %s29
      %s23 = sphi 0, %s21
      %s24 = sphi 0, %s22
      %s25 = sphi 0, %s23
      %s26 = sphi 0, %s24
      %s36 = sphi 0, %s38
      %s39 = sphi 0, %s36
      %s40 = sphi 0, %s39
      %s56 = sphi 0, %s40
      %s64 = sphi 0, %s66
      %s67 = sphi 0, %s64
      %s68 = sphi 0, %s67
      %s84 = sphi 0, %s68
      %s92 = sphi 0, %s94
      %s95 = sphi 0, %s92
      %s96 = sphi 0, %s95
      %s112 = sphi 0, %s96
      %s118 = sphi 0, %s120
      %s121 = sphi 0, %s118
      %s122 = sphi 0, %s121
      %s138 = sphi 0, %s122
      %s144 = sphi 0, %s146
      %s147 = sphi 0, %s144
      %s148 = sphi 0, %s147
      %s164 = sphi 0, %s148
      %s170 = sphi 0, %s172
      %s173 = sphi 0, %s170
      %s174 = sphi 0, %s173
      %s190 = sphi 0, %s174
    $region4: #{tpu_custom_call.1} parent=1 // loop_header_branch
      %17 = sbr.rel (%p15) target = $region8
    $region5: #{tpu_custom_call.1} parent=1 // loop_body
      %s19 = ssub.s32 %s14, 1
      %s20 = ssub.s32 %s14, 2
      %s27 = sadd.s32 1, %s22
      %p28 = scmp.ge.s32.totalorder %s27, 3
      %s29 = scalar_select %p28, 0, %s27
      %s30 = sadd.s32 1, %s21
      %s31 = scalar_select %p28, %s30, %s21
      %p32 = scmp.ge.s32.totalorder %s31, 1
      %s33 = scalar_select %p32, 0, %s31
      %s34 = ssub.s32 %s21, %s33
      %p35 = scmp.eq.s32.totalorder %s34, 0
      %s37 = sadd.s32 %s36, 1
      %s38 = scalar_select %p35, %s36, %s37
      %p41 = pneg %p35
      %p42 = scmp.eq.s32.totalorder %s14, 2
      %p43 = por %p41, %p42
      %p44 = scmp.ne.s32.totalorder %s36, %s39
      %p45 = scmp.eq.s32.totalorder %s14, 0
      %p46 = por %p44, %p45
      %p47 = scmp.ne.s32.totalorder %s36, %s39
      %p48 = scmp.eq.s32.totalorder %s19, 2
      %p49 = por %p47, %p48
      %p50 = scmp.ne.s32.totalorder %s39, %s40
      %p51 = scmp.eq.s32.totalorder %s19, 0
      %p52 = por %p50, %p51
      %p53 = scmp.ne.s32.totalorder %s39, %s40
      %p54 = scmp.eq.s32.totalorder %s20, 2
      %p55 = por %p53, %p54
      %p57 = scmp.ne.s32.totalorder %s40, %s56
      %p58 = scmp.eq.s32.totalorder %s20, 0
      %p59 = por %p57, %p58
      %s60 = ssub.s32 %s22, %s29
      %s61 = ssub.s32 %s21, %s33
      %s62 = sor.u32 %s60, %s61
      %p63 = scmp.eq.s32.totalorder %s62, 0
      %s65 = sadd.s32 %s64, 1
      %s66 = scalar_select %p63, %s64, %s65
      %p69 = pneg %p63
      %p70 = scmp.eq.s32.totalorder %s14, 2
      %p71 = por %p69, %p70
      %p72 = scmp.ne.s32.totalorder %s64, %s67
      %p73 = scmp.eq.s32.totalorder %s14, 0
      %p74 = por %p72, %p73
      %p75 = scmp.ne.s32.totalorder %s64, %s67
      %p76 = scmp.eq.s32.totalorder %s19, 2
      %p77 = por %p75, %p76
      %p78 = scmp.ne.s32.totalorder %s67, %s68
      %p79 = scmp.eq.s32.totalorder %s19, 0
      %p80 = por %p78, %p79
      %p81 = scmp.ne.s32.totalorder %s67, %s68
      %p82 = scmp.eq.s32.totalorder %s20, 2
      %p83 = por %p81, %p82
      %p85 = scmp.ne.s32.totalorder %s68, %s84
      %p86 = scmp.eq.s32.totalorder %s20, 0
      %p87 = por %p85, %p86
      %s88 = ssub.s32 %s22, %s29
      %s89 = ssub.s32 %s21, %s33
      %s90 = sor.u32 %s88, %s89
      %p91 = scmp.eq.s32.totalorder %s90, 0
      %s93 = sadd.s32 %s92, 1
      %s94 = scalar_select %p91, %s92, %s93
      %p97 = pneg %p91
      %p98 = scmp.eq.s32.totalorder %s14, 2
      %p99 = por %p97, %p98
      %p100 = scmp.ne.s32.totalorder %s92, %s95
      %p101 = scmp.eq.s32.totalorder %s14, 0
      %p102 = por %p100, %p101
      %p103 = scmp.ne.s32.totalorder %s92, %s95
      %p104 = scmp.eq.s32.totalorder %s19, 2
      %p105 = por %p103, %p104
      %p106 = scmp.ne.s32.totalorder %s95, %s96
      %p107 = scmp.eq.s32.totalorder %s19, 0
      %p108 = por %p106, %p107
      %p109 = scmp.ne.s32.totalorder %s95, %s96
      %p110 = scmp.eq.s32.totalorder %s20, 2
      %p111 = por %p109, %p110
      %p113 = scmp.ne.s32.totalorder %s96, %s112
      %p114 = scmp.eq.s32.totalorder %s20, 0
      %p115 = por %p113, %p114
      %s116 = ssub.s32 %s21, %s33
      %p117 = scmp.eq.s32.totalorder %s116, 0
      %s119 = sadd.s32 %s118, 1
      %s120 = scalar_select %p117, %s118, %s119
      %p123 = pneg %p117
      %p124 = scmp.eq.s32.totalorder %s14, 2
      %p125 = por %p123, %p124
      %p126 = scmp.ne.s32.totalorder %s118, %s121
      %p127 = scmp.eq.s32.totalorder %s14, 0
      %p128 = por %p126, %p127
      %p129 = scmp.ne.s32.totalorder %s118, %s121
      %p130 = scmp.eq.s32.totalorder %s19, 2
      %p131 = por %p129, %p130
      %p132 = scmp.ne.s32.totalorder %s121, %s122
      %p133 = scmp.eq.s32.totalorder %s19, 0
      %p134 = por %p132, %p133
      %p135 = scmp.ne.s32.totalorder %s121, %s122
      %p136 = scmp.eq.s32.totalorder %s20, 2
      %p137 = por %p135, %p136
      %p139 = scmp.ne.s32.totalorder %s122, %s138
      %p140 = scmp.eq.s32.totalorder %s20, 0
      %p141 = por %p139, %p140
      %s142 = ssub.s32 %s21, %s33
      %p143 = scmp.eq.s32.totalorder %s142, 0
      %s145 = sadd.s32 %s144, 1
      %s146 = scalar_select %p143, %s144, %s145
      %p149 = pneg %p143
      %p150 = scmp.eq.s32.totalorder %s14, 2
      %p151 = por %p149, %p150
      %p152 = scmp.ne.s32.totalorder %s144, %s147
      %p153 = scmp.eq.s32.totalorder %s14, 0
      %p154 = por %p152, %p153
      %p155 = scmp.ne.s32.totalorder %s144, %s147
      %p156 = scmp.eq.s32.totalorder %s19, 2
      %p157 = por %p155, %p156
      %p158 = scmp.ne.s32.totalorder %s147, %s148
      %p159 = scmp.eq.s32.totalorder %s19, 0
      %p160 = por %p158, %p159
      %p161 = scmp.ne.s32.totalorder %s147, %s148
      %p162 = scmp.eq.s32.totalorder %s20, 2
      %p163 = por %p161, %p162
      %p165 = scmp.ne.s32.totalorder %s148, %s164
      %p166 = scmp.eq.s32.totalorder %s20, 0
      %p167 = por %p165, %p166
      %s168 = ssub.s32 %s21, %s33
      %p169 = scmp.eq.s32.totalorder %s168, 0
      %s171 = sadd.s32 %s170, 1
      %s172 = scalar_select %p169, %s170, %s171
      %p175 = pneg %p169
      %p176 = scmp.eq.s32.totalorder %s14, 2
      %p177 = por %p175, %p176
      %p178 = scmp.ne.s32.totalorder %s170, %s173
      %p179 = scmp.eq.s32.totalorder %s14, 0
      %p180 = por %p178, %p179
      %p181 = scmp.ne.s32.totalorder %s170, %s173
      %p182 = scmp.eq.s32.totalorder %s19, 2
      %p183 = por %p181, %p182
      %p184 = scmp.ne.s32.totalorder %s173, %s174
      %p185 = scmp.eq.s32.totalorder %s19, 0
      %p186 = por %p184, %p185
      %p187 = scmp.ne.s32.totalorder %s173, %s174
      %p188 = scmp.eq.s32.totalorder %s20, 2
      %p189 = por %p187, %p188
      %p191 = scmp.ne.s32.totalorder %s174, %s190
      %p192 = scmp.eq.s32.totalorder %s20, 0
      %p193 = por %p191, %p192
      %p194 = scmp.le.s32.totalorder 1, %s14
      %p195 = scmp.lt.s32.totalorder %s14, 4
      %p196 = pnand %p194, %p195
      %p197 = pneg %p196
      // Predicated region
      $region9: #{tpu_custom_call.1} parent=5 // pred_check
        _
      $region10: #{tpu_custom_call.1} parent=5 // pred_check_branch
        %199 = sbr.rel (%p196) target = $region12
      $region11: #{tpu_custom_call.1} parent=5 // pred_region
        %s200 = ssub.s32 %s14, 1
        // Predicated region
        $region13: #{tpu_custom_call.1} parent=11 // pred_check
          %p201 = pneg %p52
        $region14: #{tpu_custom_call.1} parent=11 // pred_check_branch
          %203 = sbr.rel (%p201) target = $region16
        $region15: #{tpu_custom_call.1} parent=11 // pred_region
          %p204 = scmp.lt.s32.totalorder %s23, 0
          %s205 = scalar_select %p204, %s23, 0
          %s206 = smul.addr %s205, 8
          %s207 = scalar_lea.vmem %s0, %s206
        $region16: #{tpu_custom_call.1} parent=11 // pred_fallthru
          _
        // Predicated region
        $region17: #{tpu_custom_call.1} parent=11 // pred_check
          %p208 = pneg %p134
        $region18: #{tpu_custom_call.1} parent=11 // pred_check_branch
          %210 = sbr.rel (%p208) target = $region20
        $region19: #{tpu_custom_call.1} parent=11 // pred_region
          %p211 = scmp.lt.s32.totalorder %s23, 0
          %s212 = scalar_select %p211, %s23, 0
          %s213 = smul.addr %s212, 8
          %s214 = scalar_lea.vmem %s3, %s213
        $region20: #{tpu_custom_call.1} parent=11 // pred_fallthru
          _
      $region12: #{tpu_custom_call.1} parent=5 // pred_fallthru
        _
      %p215 = scmp.lt.s32.totalorder %s14, 3
      // Predicated region
      $region21: #{tpu_custom_call.1} parent=5 // pred_check
        %p216 = pneg %p215
      $region22: #{tpu_custom_call.1} parent=5 // pred_check_branch
        %218 = sbr.rel (%p216) target = $region24
      $region23: #{tpu_custom_call.1} parent=5 // pred_region
        // Predicated region
        $region25: #{tpu_custom_call.1} parent=23 // pred_check
          %p219 = pneg %p74
        $region26: #{tpu_custom_call.1} parent=23 // pred_check_branch
          %221 = sbr.rel (%p219) target = $region28
        $region27: #{tpu_custom_call.1} parent=23 // pred_region
          %s222 = smul.u32 16, %s22
          %s223 = ssub.s32 40, %s222
          %p224 = scmp.lt.s32.totalorder %s223, 16
          %s225 = scalar_select %p224, %s223, 16
          %s226 = smul.u32 128, %s225
          %p227 = scmp.lt.s32.totalorder %s222, 39
          %s228 = scalar_select %p227, %s222, 39
          %p229 = scmp.lt.s32.totalorder %s21, 0
          %s230 = scalar_select %p229, %s21, 0
          %s231 = sadd.s32 %s230, %s228
          %s232 = smul.addr %s231, 8
          %s233 = scalar_lea.vmem %s1, %s232
          %s234 = smul.u32 16, %s22
          %s235 = ssub.s32 40, %s234
          %p236 = scmp.lt.s32.totalorder %s235, 16
          %s237 = scalar_select %p236, %s235, 16
          %s238 = smul.u32 128, %s237
        $region28: #{tpu_custom_call.1} parent=23 // pred_fallthru
          _
        // Predicated region
        $region29: #{tpu_custom_call.1} parent=23 // pred_check
          %p239 = pneg %p102
        $region30: #{tpu_custom_call.1} parent=23 // pred_check_branch
          %241 = sbr.rel (%p239) target = $region32
        $region31: #{tpu_custom_call.1} parent=23 // pred_region
          %s242 = smul.u32 16, %s22
          %s243 = ssub.s32 40, %s242
          %p244 = scmp.lt.s32.totalorder %s243, 16
          %s245 = scalar_select %p244, %s243, 16
          %s246 = smul.u32 128, %s245
          %p247 = scmp.lt.s32.totalorder %s242, 39
          %s248 = scalar_select %p247, %s242, 39
          %p249 = scmp.lt.s32.totalorder %s21, 0
          %s250 = scalar_select %p249, %s21, 0
          %s251 = sadd.s32 %s250, %s248
          %s252 = smul.addr %s251, 8
          %s253 = scalar_lea.vmem %s2, %s252
          %s254 = smul.u32 16, %s22
          %s255 = ssub.s32 40, %s254
          %p256 = scmp.lt.s32.totalorder %s255, 16
          %s257 = scalar_select %p256, %s255, 16
          %s258 = smul.u32 128, %s257
        $region32: #{tpu_custom_call.1} parent=23 // pred_fallthru
          _
      $region24: #{tpu_custom_call.1} parent=5 // pred_fallthru
        _
      %p259 = scmp.le.s32.totalorder 1, %s14
      %p260 = scmp.lt.s32.totalorder %s14, 4
      %p261 = pnand %p259, %p260
      %p262 = pneg %p261
      // Predicated region
      $region33: #{tpu_custom_call.1} parent=5 // pred_check
        _
      $region34: #{tpu_custom_call.1} parent=5 // pred_check_branch
        %264 = sbr.rel (%p261) target = $region36
      $region35: #{tpu_custom_call.1} parent=5 // pred_region
        %s265 = ssub.s32 %s14, 1
        %p266 = scmp.lt.s32.totalorder %s23, 0
        %s267 = scalar_select %p266, %s23, 0
        %s268 = smul.addr %s267, 8
        %s269 = scalar_lea.vmem %s0, %s268
        %p270 = pneg %p52
        %p271 = pneg %p49
        %s272 = smul.u32 16, %s24
        %s273 = ssub.s32 40, %s272
        %p274 = scmp.lt.s32.totalorder %s273, 16
        %s275 = scalar_select %p274, %s273, 16
        %s276 = smul.u32 128, %s275
        %p277 = scmp.lt.s32.totalorder %s272, 39
        %s278 = scalar_select %p277, %s272, 39
        %p279 = scmp.lt.s32.totalorder %s23, 0
        %s280 = scalar_select %p279, %s23, 0
        %s281 = sadd.s32 %s280, %s278
        %s282 = smul.addr %s281, 8
        %s283 = scalar_lea.vmem %s1, %s282
        %p284 = pneg %p80
        %p285 = pneg %p77
        %s286 = smul.u32 16, %s24
        %s287 = ssub.s32 40, %s286
        %p288 = scmp.lt.s32.totalorder %s287, 16
        %s289 = scalar_select %p288, %s287, 16
        %s290 = smul.u32 128, %s289
        %p291 = scmp.lt.s32.totalorder %s286, 39
        %s292 = scalar_select %p291, %s286, 39
        %p293 = scmp.lt.s32.totalorder %s23, 0
        %s294 = scalar_select %p293, %s23, 0
        %s295 = sadd.s32 %s294, %s292
        %s296 = smul.addr %s295, 8
        %s297 = scalar_lea.vmem %s2, %s296
        %p298 = pneg %p108
        %p299 = pneg %p105
        %p300 = scmp.lt.s32.totalorder %s23, 0
        %s301 = scalar_select %p300, %s23, 0
        %s302 = smul.addr %s301, 8
        %s303 = scalar_lea.vmem %s3, %s302
        %p304 = pneg %p134
        %p305 = pneg %p131
        %p306 = pneg %p160
        %p307 = pneg %p157
        %p308 = pneg %p186
        %p309 = pneg %p183
        %p310 = scmp.lt.s32.totalorder %s23, 0
        %s311 = scalar_select %p310, %s23, 0
        %s312 = smul.addr %s311, 8
        %s313 = scalar_lea.vmem %s0, %s312
        %s314 = smul.u32 16, %s24
        %s315 = ssub.s32 40, %s314
        %p316 = scmp.lt.s32.totalorder %s315, 16
        %s317 = scalar_select %p316, %s315, 16
        %s318 = smul.u32 128, %s317
        %p319 = scmp.lt.s32.totalorder %s314, 39
        %s320 = scalar_select %p319, %s314, 39
        %p321 = scmp.lt.s32.totalorder %s23, 0
        %s322 = scalar_select %p321, %s23, 0
        %s323 = sadd.s32 %s322, %s320
        %s324 = smul.addr %s323, 8
        %s325 = scalar_lea.vmem %s1, %s324
        %s326 = smul.u32 16, %s24
        %s327 = ssub.s32 40, %s326
        %p328 = scmp.lt.s32.totalorder %s327, 16
        %s329 = scalar_select %p328, %s327, 16
        %s330 = smul.u32 128, %s329
        %s331 = smul.u32 16, %s24
        %s332 = ssub.s32 40, %s331
        %p333 = scmp.lt.s32.totalorder %s332, 16
        %s334 = scalar_select %p333, %s332, 16
        %s335 = smul.u32 128, %s334
        %p336 = scmp.lt.s32.totalorder %s331, 39
        %s337 = scalar_select %p336, %s331, 39
        %p338 = scmp.lt.s32.totalorder %s23, 0
        %s339 = scalar_select %p338, %s23, 0
        %s340 = sadd.s32 %s339, %s337
        %s341 = smul.addr %s340, 8
        %s342 = scalar_lea.vmem %s2, %s341
        %s343 = smul.u32 16, %s24
        %s344 = ssub.s32 40, %s343
        %p345 = scmp.lt.s32.totalorder %s344, 16
        %s346 = scalar_select %p345, %s344, 16
        %s347 = smul.u32 128, %s346
        %p348 = scmp.lt.s32.totalorder %s23, 0
        %s349 = scalar_select %p348, %s23, 0
        %s350 = smul.addr %s349, 8
        %s351 = scalar_lea.vmem %s3, %s350
        %p352 = scmp.eq.s32.totalorder %s24, 0
        // Predicated region
        $region37: #{tpu_custom_call.1} parent=35 // pred_check
          %p353 = pneg %p352
        $region38: #{tpu_custom_call.1} parent=35 // pred_check_branch
          %355 = sbr.rel (%p353) target = $region40
        $region39: #{tpu_custom_call.1} parent=35 // pred_region
          %vm356 = vcmask 7168
          %357 = vst.msk [vmem:[#allocation2] sm:$0xff] %vm356, -inf
          %358 = vst.msk [vmem:[#allocation3] sm:$0xff] %vm356, 0.0
          %vm359 = vcmask 392192
          %360 = vst.msk [vmem:[#allocation4] sm:$0xff] %vm359, 0.0
        $region40: #{tpu_custom_call.1} parent=35 // pred_fallthru
          _
        %v361 = vld [vmem:[%s313] sm:$0xff]
        %v362 = vld [vmem:[%s325] sm:$0xff]
        %v363 = vld [vmem:[%s325 + $0x8] sm:$0xff]
        %v364 = vld [vmem:[%s325 + $0x10] sm:$0xff]
        %v365 = vld [vmem:[%s325 + $0x18] sm:$0xff]
        %v366 = vld [vmem:[%s325 + $0x20] sm:$0xff]
        %v367 = vld [vmem:[%s325 + $0x28] sm:$0xff]
        %v368 = vld [vmem:[%s325 + $0x30] sm:$0xff]
        %v369 = vld [vmem:[%s325 + $0x38] sm:$0xff]
        %v370 = vld [vmem:[%s325 + $0x40] sm:$0xff]
        %v371 = vld [vmem:[%s325 + $0x48] sm:$0xff]
        %v372 = vld [vmem:[%s325 + $0x50] sm:$0xff]
        %v373 = vld [vmem:[%s325 + $0x58] sm:$0xff]
        %v374 = vld [vmem:[%s325 + $0x60] sm:$0xff]
        %v375 = vld [vmem:[%s325 + $0x68] sm:$0xff]
        %v376 = vld [vmem:[%s325 + $0x70] sm:$0xff]
        %v377 = vld [vmem:[%s325 + $0x78] sm:$0xff]
        %v378 = vld [vmem:[%s342] sm:$0xff]
        %v379 = vld [vmem:[%s342 + $0x8] sm:$0xff]
        %v380 = vld [vmem:[%s342 + $0x10] sm:$0xff]
        %v381 = vld [vmem:[%s342 + $0x18] sm:$0xff]
        %v382 = vld [vmem:[%s342 + $0x20] sm:$0xff]
        %v383 = vld [vmem:[%s342 + $0x28] sm:$0xff]
        %v384 = vld [vmem:[%s342 + $0x30] sm:$0xff]
        %v385 = vld [vmem:[%s342 + $0x38] sm:$0xff]
        %v386 = vld [vmem:[%s342 + $0x40] sm:$0xff]
        %v387 = vld [vmem:[%s342 + $0x48] sm:$0xff]
        %v388 = vld [vmem:[%s342 + $0x50] sm:$0xff]
        %v389 = vld [vmem:[%s342 + $0x58] sm:$0xff]
        %v390 = vld [vmem:[%s342 + $0x60] sm:$0xff]
        %v391 = vld [vmem:[%s342 + $0x68] sm:$0xff]
        %v392 = vld [vmem:[%s342 + $0x70] sm:$0xff]
        %v393 = vld [vmem:[%s342 + $0x78] sm:$0xff]
        %v394 = vld [vmem:[%s351] sm:$0xff]
        %v395 = vmul.f32 %v362, %v361
        %v396 = vmul.f32 %v363, %v361
        %v397 = vmul.f32 %v364, %v361
        %v398 = vmul.f32 %v365, %v361
        %v399 = vmul.f32 %v366, %v361
        %v400 = vmul.f32 %v367, %v361
        %v401 = vmul.f32 %v368, %v361
        %v402 = vmul.f32 %v369, %v361
        %v403 = vmul.f32 %v370, %v361
        %v404 = vmul.f32 %v371, %v361
        %v405 = vmul.f32 %v372, %v361
        %v406 = vmul.f32 %v373, %v361
        %v407 = vmul.f32 %v374, %v361
        %v408 = vmul.f32 %v375, %v361
        %v409 = vmul.f32 %v376, %v361
        %v410 = vmul.f32 %v377, %v361
        %vm411 = vcmask 261120
        %v413 = vsel %vm411, %v395, 0
        %v416 = vsel %vm411, %v396, 0
        %v419 = vsel %vm411, %v397, 0
        %v422 = vsel %vm411, %v398, 0
        %v425 = vsel %vm411, %v399, 0
        %v428 = vsel %vm411, %v400, 0
        %v431 = vsel %vm411, %v401, 0
        %v434 = vsel %vm411, %v402, 0
        %v437 = vsel %vm411, %v403, 0
        %v440 = vsel %vm411, %v404, 0
        %v443 = vsel %vm411, %v405, 0
        %v446 = vsel %vm411, %v406, 0
        %v449 = vsel %vm411, %v407, 0
        %v452 = vsel %vm411, %v408, 0
        %v455 = vsel %vm411, %v409, 0
        %v458 = vsel %vm411, %v410, 0
        %460 = vmatprep.subr.mxu0 0.0
        %461 = vmatpush1.msra.mxu0 1.0
        %462 = vmatprep.subr.mxu0 0.0
        %463 = vmatpush1.msra.mxu0 1.0
        %464 = vmatprep.subr.mxu0 0.0
        %465 = vmatpush1.msra.mxu0 1.0
        %466 = vmatprep.subr.mxu0 0.0
        %467 = vmatpush1.msra.mxu0 1.0
        %468 = vmatprep.subr.mxu0 0.0
        %469 = vmatpush1.msra.mxu0 0.0
        %470 = vmatprep.subr.mxu0 0.0
        %471 = vmatpush1.msra.mxu0 0.0
        %472 = vmatprep.subr.mxu0 0.0
        %473 = vmatpush1.msra.mxu0 0.0
        %474 = vmatprep.subr.mxu0 0.0
        %475 = vmatpush1.msra.mxu0 0.0
        %476 = vmatprep.subr.mxu0 0.0
        %477 = vmatpush1.msra.mxu0 0.0
        %478 = vmatprep.subr.mxu0 0.0
        %479 = vmatpush1.msra.mxu0 0.0
        %480 = vmatprep.subr.mxu0 0.0
        %481 = vmatpush1.msra.mxu0 0.0
        %482 = vmatprep.subr.mxu0 0.0
        %483 = vmatpush1.msra.mxu0 0.0
        %484 = vmatprep.subr.mxu0 0.0
        %485 = vmatpush1.msra.mxu0 0.0
        %486 = vmatprep.subr.mxu0 0.0
        %487 = vmatpush1.msra.mxu0 0.0
        %488 = vmatprep.subr.mxu0 0.0
        %489 = vmatpush1.msra.mxu0 0.0
        %490 = vmatprep.subr.mxu0 0.0
        %491 = vmatpush1.msra.mxu0 0.0
        %492 = vmatprep.subr.mxu0 0.0
        %493 = vmatpush1.msra.mxu0 0.0
        %494 = vmatprep.subr.mxu0 0.0
        %495 = vmatpush1.msra.mxu0 0.0
        %496 = vmatprep.subr.mxu0 0.0
        %497 = vmatpush1.msra.mxu0 0.0
        %498 = vmatprep.subr.mxu0 0.0
        %499 = vmatpush1.msra.mxu0 0.0
        %500 = vmatprep.subr.mxu0 0.0
        %501 = vmatpush1.msra.mxu0 0.0
        %502 = vmatprep.subr.mxu0 0.0
        %503 = vmatpush1.msra.mxu0 0.0
        %504 = vmatprep.subr.mxu0 0.0
        %505 = vmatpush1.msra.mxu0 0.0
        %506 = vmatprep.subr.mxu0 0.0
        %507 = vmatpush1.msra.mxu0 0.0
        %508 = vmatprep.subr.mxu0 0.0
        %509 = vmatpush1.msra.mxu0 0.0
        %510 = vmatprep.subr.mxu0 0.0
        %511 = vmatpush1.msra.mxu0 0.0
        %512 = vmatprep.subr.mxu0 0.0
        %513 = vmatpush1.msra.mxu0 0.0
        %514 = vmatprep.subr.mxu0 0.0
        %515 = vmatpush1.msra.mxu0 0.0
        %516 = vmatprep.subr.mxu0 0.0
        %517 = vmatpush1.msra.mxu0 0.0
        %518 = vmatprep.subr.mxu0 0.0
        %519 = vmatpush1.msra.mxu0 0.0
        %520 = vmatprep.subr.mxu0 0.0
        %521 = vmatpush1.msra.mxu0 0.0
        %522 = vmatprep.subr.mxu0 0.0
        %523 = vmatpush1.msra.mxu0 0.0
        %524 = vmatprep.mubr.f32.mxu0 0.0
        %525 = vmatmul.mubr.f32.gmra.mrb[0].mxu0 %v413
        %v526 = vpop.f32.mrb[0].mxu0
        %v527 = vadd.f32 0.0, %v526
        %v528 = vpop.f32.mrb[0].mxu0
        %529 = vmatprep.mubr.f32.mxu0 0.0
        %530 = vmatmul.mubr.f32.gmra.mrb[0].mxu0 %v416
        %v531 = vpop.f32.mrb[0].mxu0
        %v532 = vadd.f32 0.0, %v531
        %v533 = vpop.f32.mrb[0].mxu0
        %534 = vmatprep.mubr.f32.mxu0 0.0
        %535 = vmatmul.mubr.f32.gmra.mrb[0].mxu0 %v419
        %v536 = vpop.f32.mrb[0].mxu0
        %v537 = vadd.f32 0.0, %v536
        %v538 = vpop.f32.mrb[0].mxu0
        %539 = vmatprep.mubr.f32.mxu0 0.0
        %540 = vmatmul.mubr.f32.gmra.mrb[0].mxu0 %v422
        %v541 = vpop.f32.mrb[0].mxu0
        %v542 = vadd.f32 0.0, %v541
        %v543 = vpop.f32.mrb[0].mxu0
        %544 = vmatprep.mubr.f32.mxu0 0.0
        %545 = vmatmul.mubr.f32.gmra.mrb[0].mxu0 %v425
        %v546 = vpop.f32.mrb[0].mxu0
        %v547 = vadd.f32 0.0, %v546
        %v548 = vpop.f32.mrb[0].mxu0
        %549 = vmatprep.mubr.f32.mxu0 0.0
        %550 = vmatmul.mubr.f32.gmra.mrb[0].mxu0 %v428
        %v551 = vpop.f32.mrb[0].mxu0
        %v552 = vadd.f32 0.0, %v551
        %v553 = vpop.f32.mrb[0].mxu0
        %554 = vmatprep.mubr.f32.mxu0 0.0
        %555 = vmatmul.mubr.f32.gmra.mrb[0].mxu0 %v431
        %v556 = vpop.f32.mrb[0].mxu0
        %v557 = vadd.f32 0.0, %v556
        %v558 = vpop.f32.mrb[0].mxu0
        %559 = vmatprep.mubr.f32.mxu0 0.0
        %560 = vmatmul.mubr.f32.gmra.mrb[0].mxu0 %v434
        %v561 = vpop.f32.mrb[0].mxu0
        %v562 = vadd.f32 0.0, %v561
        %v563 = vpop.f32.mrb[0].mxu0
        %564 = vmatprep.mubr.f32.mxu0 0.0
        %565 = vmatmul.mubr.f32.gmra.mrb[0].mxu0 %v437
        %v566 = vpop.f32.mrb[0].mxu0
        %v567 = vadd.f32 0.0, %v566
        %v568 = vpop.f32.mrb[0].mxu0
        %569 = vmatprep.mubr.f32.mxu0 0.0
        %570 = vmatmul.mubr.f32.gmra.mrb[0].mxu0 %v440
        %v571 = vpop.f32.mrb[0].mxu0
        %v572 = vadd.f32 0.0, %v571
        %v573 = vpop.f32.mrb[0].mxu0
        %574 = vmatprep.mubr.f32.mxu0 0.0
        %575 = vmatmul.mubr.f32.gmra.mrb[0].mxu0 %v443
        %v576 = vpop.f32.mrb[0].mxu0
        %v577 = vadd.f32 0.0, %v576
        %v578 = vpop.f32.mrb[0].mxu0
        %579 = vmatprep.mubr.f32.mxu0 0.0
        %580 = vmatmul.mubr.f32.gmra.mrb[0].mxu0 %v446
        %v581 = vpop.f32.mrb[0].mxu0
        %v582 = vadd.f32 0.0, %v581
        %v583 = vpop.f32.mrb[0].mxu0
        %584 = vmatprep.mubr.f32.mxu0 0.0
        %585 = vmatmul.mubr.f32.gmra.mrb[0].mxu0 %v449
        %v586 = vpop.f32.mrb[0].mxu0
        %v587 = vadd.f32 0.0, %v586
        %v588 = vpop.f32.mrb[0].mxu0
        %589 = vmatprep.mubr.f32.mxu0 0.0
        %590 = vmatmul.mubr.f32.gmra.mrb[0].mxu0 %v452
        %v591 = vpop.f32.mrb[0].mxu0
        %v592 = vadd.f32 0.0, %v591
        %v593 = vpop.f32.mrb[0].mxu0
        %594 = vmatprep.mubr.f32.mxu0 0.0
        %595 = vmatmul.mubr.f32.gmra.mrb[0].mxu0 %v455
        %v596 = vpop.f32.mrb[0].mxu0
        %v597 = vadd.f32 0.0, %v596
        %v598 = vpop.f32.mrb[0].mxu0
        %599 = vmatprep.mubr.f32.mxu0 0.0
        %600 = vmatmul.mubr.f32.gmra.mrb[0].mxu0 %v458
        %v601 = vpop.f32.mrb[0].mxu0
        %v602 = vadd.f32 0.0, %v601
        %v603 = vpop.f32.mrb[0].mxu0
        %604 = vdwg.mxu0
        %s605 = smul.u32 %s24, 16
        %v606 = vstv %s605
        %v607 = vadd.s32 %v606, 1
        %v608 = vadd.s32 %v606, 2
        %v609 = vadd.s32 %v606, 3
        %v610 = vadd.s32 %v606, 4
        %v611 = vadd.s32 %v606, 5
        %v612 = vadd.s32 %v606, 6
        %v613 = vadd.s32 %v606, 7
        %v614 = vadd.s32 %v606, 8
        %v615 = vadd.s32 %v606, 9
        %v616 = vadd.s32 %v606, 10
        %v617 = vadd.s32 %v606, 11
        %v618 = vadd.s32 %v606, 12
        %v619 = vadd.s32 %v606, 13
        %v620 = vadd.s32 %v606, 14
        %v621 = vadd.s32 %v606, 15
        %vm622 = vcmp.lt.s32.totalorder %v606, %v394
        %vm623 = vcmp.lt.s32.totalorder %v607, %v394
        %vm624 = vcmp.lt.s32.totalorder %v608, %v394
        %vm625 = vcmp.lt.s32.totalorder %v609, %v394
        %vm626 = vcmp.lt.s32.totalorder %v610, %v394
        %vm627 = vcmp.lt.s32.totalorder %v611, %v394
        %vm628 = vcmp.lt.s32.totalorder %v612, %v394
        %vm629 = vcmp.lt.s32.totalorder %v613, %v394
        %vm630 = vcmp.lt.s32.totalorder %v614, %v394
        %vm631 = vcmp.lt.s32.totalorder %v615, %v394
        %vm632 = vcmp.lt.s32.totalorder %v616, %v394
        %vm633 = vcmp.lt.s32.totalorder %v617, %v394
        %vm634 = vcmp.lt.s32.totalorder %v618, %v394
        %vm635 = vcmp.lt.s32.totalorder %v619, %v394
        %vm636 = vcmp.lt.s32.totalorder %v620, %v394
        %vm637 = vcmp.lt.s32.totalorder %v621, %v394
        %v638 = vsel %vm622, %v527, 0.0
        %v639 = vsel %vm623, %v532, 0.0
        %v640 = vsel %vm624, %v537, 0.0
        %v641 = vsel %vm625, %v542, 0.0
        %v642 = vsel %vm626, %v547, 0.0
        %v643 = vsel %vm627, %v552, 0.0
        %v644 = vsel %vm628, %v557, 0.0
        %v645 = vsel %vm629, %v562, 0.0
        %v646 = vsel %vm630, %v567, 0.0
        %v647 = vsel %vm631, %v572, 0.0
        %v648 = vsel %vm632, %v577, 0.0
        %v649 = vsel %vm633, %v582, 0.0
        %v650 = vsel %vm634, %v587, 0.0
        %v651 = vsel %vm635, %v592, 0.0
        %v652 = vsel %vm636, %v597, 0.0
        %v653 = vsel %vm637, %v602, 0.0
        %vm654 = vcmp.lt.s32.totalorder %v606, 40
        %vm655 = vcmp.lt.s32.totalorder %v607, 40
        %vm656 = vcmp.lt.s32.totalorder %v608, 40
        %vm657 = vcmp.lt.s32.totalorder %v609, 40
        %vm658 = vcmp.lt.s32.totalorder %v610, 40
        %vm659 = vcmp.lt.s32.totalorder %v611, 40
        %vm660 = vcmp.lt.s32.totalorder %v612, 40
        %vm661 = vcmp.lt.s32.totalorder %v613, 40
        %vm662 = vcmp.lt.s32.totalorder %v614, 40
        %vm663 = vcmp.lt.s32.totalorder %v615, 40
        %vm664 = vcmp.lt.s32.totalorder %v616, 40
        %vm665 = vcmp.lt.s32.totalorder %v617, 40
        %vm666 = vcmp.lt.s32.totalorder %v618, 40
        %vm667 = vcmp.lt.s32.totalorder %v619, 40
        %vm668 = vcmp.lt.s32.totalorder %v620, 40
        %vm669 = vcmp.lt.s32.totalorder %v621, 40
        %v670 = vsel %vm654, %v638, -inf
        %v671 = vsel %vm655, %v639, -inf
        %v672 = vsel %vm656, %v640, -inf
        %v673 = vsel %vm657, %v641, -inf
        %v674 = vsel %vm658, %v642, -inf
        %v675 = vsel %vm659, %v643, -inf
        %v676 = vsel %vm660, %v644, -inf
        %v677 = vsel %vm661, %v645, -inf
        %v678 = vsel %vm662, %v646, -inf
        %v679 = vsel %vm663, %v647, -inf
        %v680 = vsel %vm664, %v648, -inf
        %v681 = vsel %vm665, %v649, -inf
        %v682 = vsel %vm666, %v650, -inf
        %v683 = vsel %vm667, %v651, -inf
        %v684 = vsel %vm668, %v652, -inf
        %v685 = vsel %vm669, %v653, -inf
        %v686 = vsel %vm654, 1, 0
        %v687 = vsel %vm655, 1, 0
        %v688 = vsel %vm656, 1, 0
        %v689 = vsel %vm657, 1, 0
        %v690 = vsel %vm658, 1, 0
        %v691 = vsel %vm659, 1, 0
        %v692 = vsel %vm660, 1, 0
        %v693 = vsel %vm661, 1, 0
        %v694 = vsel %vm662, 1, 0
        %v695 = vsel %vm663, 1, 0
        %v696 = vsel %vm664, 1, 0
        %v697 = vsel %vm665, 1, 0
        %v698 = vsel %vm666, 1, 0
        %v699 = vsel %vm667, 1, 0
        %v700 = vsel %vm668, 1, 0
        %v701 = vsel %vm669, 1, 0
        %vm702 = vcmp.eq.s32.totalorder %v686, 1
        %vm703 = vcmp.eq.s32.totalorder %v687, 1
        %vm704 = vcmp.eq.s32.totalorder %v688, 1
        %vm705 = vcmp.eq.s32.totalorder %v689, 1
        %vm706 = vcmp.eq.s32.totalorder %v690, 1
        %vm707 = vcmp.eq.s32.totalorder %v691, 1
        %vm708 = vcmp.eq.s32.totalorder %v692, 1
        %vm709 = vcmp.eq.s32.totalorder %v693, 1
        %vm710 = vcmp.eq.s32.totalorder %v694, 1
        %vm711 = vcmp.eq.s32.totalorder %v695, 1
        %vm712 = vcmp.eq.s32.totalorder %v696, 1
        %vm713 = vcmp.eq.s32.totalorder %v697, 1
        %vm714 = vcmp.eq.s32.totalorder %v698, 1
        %vm715 = vcmp.eq.s32.totalorder %v699, 1
        %vm716 = vcmp.eq.s32.totalorder %v700, 1
        %vm717 = vcmp.eq.s32.totalorder %v701, 1
        %v718 = vsel %vm702, %v378, 0.0
        %v719 = vsel %vm703, %v379, 0.0
        %v720 = vsel %vm704, %v380, 0.0
        %v721 = vsel %vm705, %v381, 0.0
        %v722 = vsel %vm706, %v382, 0.0
        %v723 = vsel %vm707, %v383, 0.0
        %v724 = vsel %vm708, %v384, 0.0
        %v725 = vsel %vm709, %v385, 0.0
        %v726 = vsel %vm710, %v386, 0.0
        %v727 = vsel %vm711, %v387, 0.0
        %v728 = vsel %vm712, %v388, 0.0
        %v729 = vsel %vm713, %v389, 0.0
        %v730 = vsel %vm714, %v390, 0.0
        %v731 = vsel %vm715, %v391, 0.0
        %v732 = vsel %vm716, %v392, 0.0
        %v733 = vsel %vm717, %v393, 0.0
        %v734 = vld [vmem:[#allocation2] sm:$0xff]
        %vm735 = vcmask 7168
        %v736 = vsel %vm735, %v670, -inf
        %v737 = vsel %vm735, %v671, -inf
        %v738 = vsel %vm735, %v672, -inf
        %v739 = vsel %vm735, %v673, -inf
        %v740 = vsel %vm735, %v674, -inf
        %v741 = vmax.f32 %v736, %v740
        %v742 = vsel %vm735, %v675, -inf
        %v743 = vmax.f32 %v737, %v742
        %v744 = vsel %vm735, %v676, -inf
        %v745 = vmax.f32 %v738, %v744
        %v746 = vsel %vm735, %v677, -inf
        %v747 = vmax.f32 %v739, %v746
        %v748 = vsel %vm735, %v678, -inf
        %v749 = vmax.f32 %v741, %v748
        %v750 = vsel %vm735, %v679, -inf
        %v751 = vmax.f32 %v743, %v750
        %v752 = vsel %vm735, %v680, -inf
        %v753 = vmax.f32 %v745, %v752
        %v754 = vsel %vm735, %v681, -inf
        %v755 = vmax.f32 %v747, %v754
        %v756 = vsel %vm735, %v682, -inf
        %v757 = vmax.f32 %v749, %v756
        %v758 = vsel %vm735, %v683, -inf
        %v759 = vmax.f32 %v751, %v758
        %v760 = vsel %vm735, %v684, -inf
        %v761 = vmax.f32 %v753, %v760
        %v762 = vsel %vm735, %v685, -inf
        %v763 = vmax.f32 %v755, %v762
        %v764 = vmax.f32 %v757, %v759
        %v765 = vmax.f32 %v761, %v763
        %v766 = vmax.f32 %v764, %v765
        %v767 = vmax.f32 %v734, %v766
        %v768 = vsub.f32 %v734, %v767
        %v769 = vmul.f32 %v768, 1.442695
        %v770 = vpow.pop %v769
        %v771 = vsub.f32 %v670, %v767
        %v772 = vsub.f32 %v671, %v767
        %v773 = vsub.f32 %v672, %v767
        %v774 = vsub.f32 %v673, %v767
        %v775 = vsub.f32 %v674, %v767
        %v776 = vsub.f32 %v675, %v767
        %v777 = vsub.f32 %v676, %v767
        %v778 = vsub.f32 %v677, %v767
        %v779 = vsub.f32 %v678, %v767
        %v780 = vsub.f32 %v679, %v767
        %v781 = vsub.f32 %v680, %v767
        %v782 = vsub.f32 %v681, %v767
        %v783 = vsub.f32 %v682, %v767
        %v784 = vsub.f32 %v683, %v767
        %v785 = vsub.f32 %v684, %v767
        %v786 = vsub.f32 %v685, %v767
        %v787 = vmul.f32 %v771, 1.442695
        %v788 = vpow.pop %v787
        %v789 = vmul.f32 %v772, 1.442695
        %v790 = vpow.pop %v789
        %v791 = vmul.f32 %v773, 1.442695
        %v792 = vpow.pop %v791
        %v793 = vmul.f32 %v774, 1.442695
        %v794 = vpow.pop %v793
        %v795 = vmul.f32 %v775, 1.442695
        %v796 = vpow.pop %v795
        %v797 = vmul.f32 %v776, 1.442695
        %v798 = vpow.pop %v797
        %v799 = vmul.f32 %v777, 1.442695
        %v800 = vpow.pop %v799
        %v801 = vmul.f32 %v778, 1.442695
        %v802 = vpow.pop %v801
        %v803 = vmul.f32 %v779, 1.442695
        %v804 = vpow.pop %v803
        %v805 = vmul.f32 %v780, 1.442695
        %v806 = vpow.pop %v805
        %v807 = vmul.f32 %v781, 1.442695
        %v808 = vpow.pop %v807
        %v809 = vmul.f32 %v782, 1.442695
        %v810 = vpow.pop %v809
        %v811 = vmul.f32 %v783, 1.442695
        %v812 = vpow.pop %v811
        %v813 = vmul.f32 %v784, 1.442695
        %v814 = vpow.pop %v813
        %v815 = vmul.f32 %v785, 1.442695
        %v816 = vpow.pop %v815
        %v817 = vmul.f32 %v786, 1.442695
        %v818 = vpow.pop %v817
        %v819 = vld [vmem:[#allocation3] sm:$0xff]
        %v820 = vmul.f32 %v770, %v819
        %v821 = vsel %vm735, %v788, 0.0
        %v822 = vsel %vm735, %v790, 0.0
        %v823 = vadd.f32 %v821, %v822
        %v824 = vsel %vm735, %v792, 0.0
        %v825 = vadd.f32 %v823, %v824
        %v826 = vsel %vm735, %v794, 0.0
        %v827 = vadd.f32 %v825, %v826
        %v828 = vsel %vm735, %v796, 0.0
        %v829 = vadd.f32 %v827, %v828
        %v830 = vsel %vm735, %v798, 0.0
        %v831 = vadd.f32 %v829, %v830
        %v832 = vsel %vm735, %v800, 0.0
        %v833 = vadd.f32 %v831, %v832
        %v834 = vsel %vm735, %v802, 0.0
        %v835 = vadd.f32 %v833, %v834
        %v836 = vsel %vm735, %v804, 0.0
        %v837 = vadd.f32 %v835, %v836
        %v838 = vsel %vm735, %v806, 0.0
        %v839 = vadd.f32 %v837, %v838
        %v840 = vsel %vm735, %v808, 0.0
        %v841 = vadd.f32 %v839, %v840
        %v842 = vsel %vm735, %v810, 0.0
        %v843 = vadd.f32 %v841, %v842
        %v844 = vsel %vm735, %v812, 0.0
        %v845 = vadd.f32 %v843, %v844
        %v846 = vsel %vm735, %v814, 0.0
        %v847 = vadd.f32 %v845, %v846
        %v848 = vsel %vm735, %v816, 0.0
        %v849 = vadd.f32 %v847, %v848
        %v850 = vsel %vm735, %v818, 0.0
        %v851 = vadd.f32 %v849, %v850
        %v852 = vadd.f32 %v820, %v851
        %853 = vst.msk [vmem:[#allocation3] sm:$0xff] %vm735, %v852
        %v854 = vld [vmem:[#allocation4] sm:$0xff]
        %856 = vset.pattern.permute.xlu0 0
        %857 = vperm.xlu0 %856, %v770
        %v858 = vpop.permute.xlu0 %857
        %v860 = vmul.f32 %v858, %v854
        %862 = vset.pattern.permute.xlu0 0
        %863 = vperm.xlu0 %862, %v788
        %v864 = vpop.permute.xlu0 %863
        %867 = vset.pattern.permute.xlu0 0
        %868 = vperm.xlu0 %867, %v790
        %v869 = vpop.permute.xlu0 %868
        %872 = vset.pattern.permute.xlu0 0
        %873 = vperm.xlu0 %872, %v792
        %v874 = vpop.permute.xlu0 %873
        %877 = vset.pattern.permute.xlu0 0
        %878 = vperm.xlu0 %877, %v794
        %v879 = vpop.permute.xlu0 %878
        %882 = vset.pattern.permute.xlu0 0
        %883 = vperm.xlu0 %882, %v796
        %v884 = vpop.permute.xlu0 %883
        %887 = vset.pattern.permute.xlu0 0
        %888 = vperm.xlu0 %887, %v798
        %v889 = vpop.permute.xlu0 %888
        %892 = vset.pattern.permute.xlu0 0
        %893 = vperm.xlu0 %892, %v800
        %v894 = vpop.permute.xlu0 %893
        %897 = vset.pattern.permute.xlu0 0
        %898 = vperm.xlu0 %897, %v802
        %v899 = vpop.permute.xlu0 %898
        %902 = vset.pattern.permute.xlu0 0
        %903 = vperm.xlu0 %902, %v804
        %v904 = vpop.permute.xlu0 %903
        %907 = vset.pattern.permute.xlu0 0
        %908 = vperm.xlu0 %907, %v806
        %v909 = vpop.permute.xlu0 %908
        %912 = vset.pattern.permute.xlu0 0
        %913 = vperm.xlu0 %912, %v808
        %v914 = vpop.permute.xlu0 %913
        %917 = vset.pattern.permute.xlu0 0
        %918 = vperm.xlu0 %917, %v810
        %v919 = vpop.permute.xlu0 %918
        %922 = vset.pattern.permute.xlu0 0
        %923 = vperm.xlu0 %922, %v812
        %v924 = vpop.permute.xlu0 %923
        %927 = vset.pattern.permute.xlu0 0
        %928 = vperm.xlu0 %927, %v814
        %v929 = vpop.permute.xlu0 %928
        %932 = vset.pattern.permute.xlu0 0
        %933 = vperm.xlu0 %932, %v816
        %v934 = vpop.permute.xlu0 %933
        %937 = vset.pattern.permute.xlu0 0
        %938 = vperm.xlu0 %937, %v818
        %v939 = vpop.permute.xlu0 %938
        %v941 = vmul.f32 %v864, %v718
        %v942 = vmul.f32 %v869, %v719
        %v943 = vmul.f32 %v874, %v720
        %v944 = vmul.f32 %v879, %v721
        %v945 = vmul.f32 %v884, %v722
        %v946 = vmul.f32 %v889, %v723
        %v947 = vmul.f32 %v894, %v724
        %v948 = vmul.f32 %v899, %v725
        %v949 = vmul.f32 %v904, %v726
        %v950 = vmul.f32 %v909, %v727
        %v951 = vmul.f32 %v914, %v728
        %v952 = vmul.f32 %v919, %v729
        %v953 = vmul.f32 %v924, %v730
        %v954 = vmul.f32 %v929, %v731
        %v955 = vmul.f32 %v934, %v732
        %v956 = vmul.f32 %v939, %v733
        %vm957 = vcmask 392192
        %v958 = vsel %vm957, %v941, 0.0
        %v959 = vsel %vm957, %v942, 0.0
        %v960 = vadd.f32 %v958, %v959
        %v961 = vsel %vm957, %v943, 0.0
        %v962 = vadd.f32 %v960, %v961
        %v963 = vsel %vm957, %v944, 0.0
        %v964 = vadd.f32 %v962, %v963
        %v965 = vsel %vm957, %v945, 0.0
        %v966 = vadd.f32 %v964, %v965
        %v967 = vsel %vm957, %v946, 0.0
        %v968 = vadd.f32 %v966, %v967
        %v969 = vsel %vm957, %v947, 0.0
        %v970 = vadd.f32 %v968, %v969
        %v971 = vsel %vm957, %v948, 0.0
        %v972 = vadd.f32 %v970, %v971
        %v973 = vsel %vm957, %v949, 0.0
        %v974 = vadd.f32 %v972, %v973
        %v975 = vsel %vm957, %v950, 0.0
        %v976 = vadd.f32 %v974, %v975
        %v977 = vsel %vm957, %v951, 0.0
        %v978 = vadd.f32 %v976, %v977
        %v979 = vsel %vm957, %v952, 0.0
        %v980 = vadd.f32 %v978, %v979
        %v981 = vsel %vm957, %v953, 0.0
        %v982 = vadd.f32 %v980, %v981
        %v983 = vsel %vm957, %v954, 0.0
        %v984 = vadd.f32 %v982, %v983
        %v985 = vsel %vm957, %v955, 0.0
        %v986 = vadd.f32 %v984, %v985
        %v987 = vsel %vm957, %v956, 0.0
        %v988 = vadd.f32 %v986, %v987
        %v989 = vadd.f32 %v860, %v988
        %990 = vst.msk [vmem:[#allocation4] sm:$0xff] %vm957, %v989
        %991 = vst.msk [vmem:[#allocation2] sm:$0xff] %vm735, %v767
        %p992 = scmp.eq.s32.totalorder %s24, 2
        // Predicated region
        $region41: #{tpu_custom_call.1} parent=35 // pred_check
          %p993 = pneg %p992
        $region42: #{tpu_custom_call.1} parent=35 // pred_check_branch
          %995 = sbr.rel (%p993) target = $region44
        $region43: #{tpu_custom_call.1} parent=35 // pred_region
          %v996 = vld [vmem:[#allocation4] sm:$0xff]
          %v997 = vld [vmem:[#allocation3] sm:$0xff]
          %999 = vset.pattern.permute.xlu0 0
          %1000 = vperm.xlu0 %999, %v997
          %v1001 = vpop.permute.xlu0 %1000
          %v1003 = vrcp.pop %v1001
          %v1004 = vmul.f32 %v996, %v1003
          %1005 = vst.msk [vmem:[#allocation5] sm:$0xff] %vm957, %v1004
          %v1006 = vlaneseq
          %v1007 = vand.u32 %v1006, 127
          %1008 = vset.pattern.permute.xlu0 0
          %1009 = vperm.xlu0 %1008, %v394
          %v1010 = vpop.permute.xlu0 %1009
          %vm1011 = vcmp.lt.s32.totalorder %v1007, %v1010
          %v1012 = vsel %vm1011, 1, 0
          %v1013 = vcvt.s32.f32 %v1012
          %vm1014 = vcmask 326656
          %1015 = vst.msk [vmem:[#allocation7] sm:$0xff] %vm1014, %v1013
        $region44: #{tpu_custom_call.1} parent=35 // pred_fallthru
          _
        // Predicated region
        $region45: #{tpu_custom_call.1} parent=35 // pred_check
          %p1016 = pneg %p157
        $region46: #{tpu_custom_call.1} parent=35 // pred_check_branch
          %1018 = sbr.rel (%p1016) target = $region48
        $region47: #{tpu_custom_call.1} parent=35 // pred_region
          %s1020 = ssub.s32 128, 128
          %1021 = vsyncadd [#allocation6], %s1020
          %s1022 = smul.addr %s23, 128
          %s1023 = scalar_lea.hbm %s4, %s1022
          %s1025 = sshll.u32 [#allocation5], 4
          %s1026 = int_to_ptr.vmem [resolvable:$true] %s1025
          %1028 = dma.vmem_to_hbm [thread:$0]  %s1026, 128, %s1023, [#allocation6]
        $region48: #{tpu_custom_call.1} parent=35 // pred_fallthru
          _
        // Predicated region
        $region49: #{tpu_custom_call.1} parent=35 // pred_check
          %p1029 = pneg %p183
        $region50: #{tpu_custom_call.1} parent=35 // pred_check_branch
          %1031 = sbr.rel (%p1029) target = $region52
        $region51: #{tpu_custom_call.1} parent=35 // pred_region
          %s1033 = ssub.s32 128, 128
          %1034 = vsyncadd [#allocation8], %s1033
          %s1035 = smul.addr %s23, 128
          %s1036 = scalar_lea.hbm %s5, %s1035
          %s1038 = sshll.u32 [#allocation7], 4
          %s1039 = int_to_ptr.vmem [resolvable:$true] %s1038
          %1041 = dma.vmem_to_hbm [thread:$0]  %s1039, 128, %s1036, [#allocation8]
        $region52: #{tpu_custom_call.1} parent=35 // pred_fallthru
          _
        // Predicated region
        $region53: #{tpu_custom_call.1} parent=35 // pred_check
          %p1042 = pneg %p157
        $region54: #{tpu_custom_call.1} parent=35 // pred_check_branch
          %1044 = sbr.rel (%p1042) target = $region56
        $region55: #{tpu_custom_call.1} parent=35 // pred_region
          %1045 = dma.done [#allocation6], 128
        $region56: #{tpu_custom_call.1} parent=35 // pred_fallthru
          _
        // Predicated region
        $region57: #{tpu_custom_call.1} parent=35 // pred_check
          %p1046 = pneg %p183
        $region58: #{tpu_custom_call.1} parent=35 // pred_check_branch
          %1048 = sbr.rel (%p1046) target = $region60
        $region59: #{tpu_custom_call.1} parent=35 // pred_region
          %1049 = dma.done [#allocation8], 128
        $region60: #{tpu_custom_call.1} parent=35 // pred_fallthru
          _
      $region36: #{tpu_custom_call.1} parent=5 // pred_fallthru
        _
      %p1050 = scmp.le.s32.totalorder 2, %s14
      // Predicated region
      $region61: #{tpu_custom_call.1} parent=5 // pred_check
        %p1051 = pneg %p1050
      $region62: #{tpu_custom_call.1} parent=5 // pred_check_branch
        %1053 = sbr.rel (%p1051) target = $region64
      $region63: #{tpu_custom_call.1} parent=5 // pred_region
        %s1054 = ssub.s32 %s14, 2
      $region64: #{tpu_custom_call.1} parent=5 // pred_fallthru
        _
    $region6: #{tpu_custom_call.1} parent=1 // loop_footer
      %s18 = sadd.s32 1, %s14
    $region7: #{tpu_custom_call.1} parent=1 // loop_footer_branch
      %13 = sbr.rel target = $region3
    $region8: #{tpu_custom_call.1} parent=1 // loop_exit
      _
    %1055 = vsyncpa [#allocation6], 1
    %s1056 = scalar_lea.sflag [#allocation6], 1
    %1057 = vsyncpa %s1056, 1
    %1058 = vsyncpa [#allocation8], 1

</llo_original>
